<compile_context>
chip_gen: v5e
topology: v5e:2x2
jax: 0.10.0
libtpu: 0.0.40
codegen_flags: <defaults>
</compile_context>

<pallas_src>
import functools

import jax
import jax.numpy as jnp
from jax import lax
from jax.experimental import pallas as pl
from jax.experimental.pallas import tpu as pltpu


# ---------------------------------------------------------------------------
# sizing constants / helpers
# ---------------------------------------------------------------------------

def _round_up(x: int, m: int) -> int:
    return ((x + m - 1) // m) * m


MAX_TOKENS_PER_CALL = 64 * 1024           # bounds scalar-prefetch SMEM (<=256 KiB padded)
VMEM_FAST_PATH_BUDGET = 24 * 1024 * 1024  # conservative for v7x (64 MiB phys / 32 MiB scoped)
VMEM_LIMIT_BYTES = 32 * 1024 * 1024       # safe scoped-VMEM limit on v5e / v6e / v7x
OUT_TILE_BYTES_CAP = 4 * 1024 * 1024      # per pipeline buffer (x2 buffers)


def _choose_tile_m(n: int, row_bytes_vmem: int, prefer: int = 512) -> int:
    """Rows of output produced per grid step (multiple of 8)."""
    n8 = _round_up(max(n, 1), 8)
    cap = max(8, (OUT_TILE_BYTES_CAP // max(row_bytes_vmem, 1)) // 8 * 8)
    tile = min(prefer, cap, n8)
    # Aim for >= 2 grid steps so the "parallel" axis can shard across the two
    # TensorCores on v7x (harmless on 1-TC v5e/v6e).
    if n8 // tile < 2 and n8 >= 16:
        tile = min(tile, _round_up((n8 + 1) // 2, 8))
    return tile


# ---------------------------------------------------------------------------
# Path 1: table resident in VMEM, in-kernel gather (no per-row DMAs)
# ---------------------------------------------------------------------------

def _embed_vmem_kernel(ids_ref, w_ref, out_ref):
    """out_ref[k, :] = w_ref[ids[i*tile_m + k], :]

    ids_ref : (n_pad,) int32 in SMEM (scalar-prefetched token ids)
    w_ref   : (V, E) table, resident in VMEM (constant index_map)
    out_ref : (tile_m, E) output tile in VMEM (pipelined)
    """
    tile_m = out_ref.shape[0]
    base = pl.program_id(0) * tile_m
    GROUP = 8  # gather 8 rows, then do one sublane-aligned (8, E) store

    n_groups = tile_m // GROUP

    def body(g, carry):
        row0 = pl.multiple_of(g * GROUP, GROUP)
        rows = [
            w_ref[pl.ds(ids_ref[base + row0 + r], 1), :]   # (1, E) dynamic row load
            for r in range(GROUP)                           # statically unrolled
        ]
        out_ref[pl.ds(row0, GROUP), :] = jnp.concatenate(rows, axis=0)
        return carry

    lax.fori_loop(0, n_groups, body, 0, unroll=min(8, n_groups))


# ---------------------------------------------------------------------------
# Path 2: table in HBM, sliding-window DMA row gather
# ---------------------------------------------------------------------------

def _embed_hbm_kernel(ids_ref, w_hbm, out_ref, sem, *, window):
    """DMA row-gather with `window` outstanding copies.

    ids_ref : (n_pad,) int32 in SMEM (scalar-prefetched token ids)
    w_hbm   : (V, E) weight table, left in HBM (memory_space=pl.ANY)
    out_ref : (tile_m, E) output tile in VMEM (pipelined)
    sem     : (window,) DMA semaphores (one outstanding copy per slot)
    """
    tile_m = out_ref.shape[0]
    base = pl.program_id(0) * tile_m
    mask = window - 1  # window is a power of two

    def issue(k):
        tok = ids_ref[base + k]
        pltpu.make_async_copy(
            w_hbm.at[pl.ds(tok, 1)],        # (1, E) row in HBM
            out_ref.at[pl.ds(k, 1)],        # (1, E) row of the output tile
            sem.at[k & mask],
        ).start()

    def drain(k):
        # Address-independent wait descriptor: only the semaphore slot and the
        # (1, E) transfer size matter, so no ids re-read / address math here.
        pltpu.make_async_copy(
            w_hbm.at[pl.ds(0, 1)],
            out_ref.at[pl.ds(0, 1)],
            sem.at[k & mask],
        ).wait()

    # Prime the window (k static -> fully unrolled, static sem slots).
    for k in range(window):
        issue(k)

    # Steady state: wait oldest, immediately issue the next (unrolled so the
    # scalar slots / descriptor pushes co-issue across iterations).
    if tile_m > window:
        def steady(k, carry):
            drain(k - window)
            issue(k)
            return carry
        lax.fori_loop(window, tile_m, steady, 0,
                      unroll=min(4, tile_m - window))

    # Drain the tail (static unroll).
    for k in range(tile_m - window, tile_m):
        drain(k)


# ---------------------------------------------------------------------------
# Wrapper / dispatch
# ---------------------------------------------------------------------------

def _embed_call(flat_ids, weight, *, force_hbm=False):
    n = flat_ids.shape[0]
    V, E = weight.shape
    itemsize = jnp.dtype(weight.dtype).itemsize
    e_pad = _round_up(E, 128)                     # lane padding in VMEM
    sublane = 8 * max(1, 4 // itemsize)           # f32: 8, bf16: 16, int8: 32
    row_bytes = e_pad * itemsize
    table_vmem_bytes = _round_up(V, sublane) * row_bytes

    tile_m = _choose_tile_m(n, row_bytes)
    n_pad = _round_up(n, tile_m)
    if n_pad != n:
        # Padded tail rows gather row 0 (at most one tile of waste, sliced off).
        flat_ids = jnp.pad(flat_ids, (0, n_pad - n))
    grid = (n_pad // tile_m,)

    out_tile_bytes = tile_m * row_bytes
    # 2x: the pipeline double-buffers both the (constant) table block and the
    # output tile.
    vmem_fast_path = (not force_hbm) and (
        2 * table_vmem_bytes + 2 * out_tile_bytes <= VMEM_FAST_PATH_BUDGET)

    out_shape = jax.ShapeDtypeStruct((n_pad, E), weight.dtype)

    if vmem_fast_path:
        cost = pl.CostEstimate(
            flops=0, transcendentals=0,
            bytes_accessed=V * E * itemsize + n_pad * E * itemsize + n_pad * 4)
        out = pl.pallas_call(
            _embed_vmem_kernel,
            out_shape=out_shape,
            grid_spec=pltpu.PrefetchScalarGridSpec(
                num_scalar_prefetch=1,                   # flat ids -> SMEM
                grid=grid,
                in_specs=[
                    # Full table, constant block index -> fetched once, resident.
                    pl.BlockSpec((V, E), lambda i, ids: (0, 0)),
                ],
                out_specs=pl.BlockSpec((tile_m, E), lambda i, ids: (i, 0)),
            ),
            compiler_params=pltpu.CompilerParams(
                dimension_semantics=("parallel",),
                vmem_limit_bytes=VMEM_LIMIT_BYTES,
            ),
            cost_estimate=cost,
        )(flat_ids, weight)
    else:
        window = min(16, tile_m)   # power of two (tile_m is a multiple of 8)
        cost = pl.CostEstimate(
            flops=0, transcendentals=0,
            bytes_accessed=2 * n_pad * E * itemsize + n_pad * 4)
        out = pl.pallas_call(
            functools.partial(_embed_hbm_kernel, window=window),
            out_shape=out_shape,
            grid_spec=pltpu.PrefetchScalarGridSpec(
                num_scalar_prefetch=1,                   # flat ids -> SMEM
                grid=grid,
                in_specs=[
                    # Full table stays in HBM; rows are gathered by manual DMA.
                    pl.BlockSpec(memory_space=pl.ANY),
                ],
                out_specs=pl.BlockSpec((tile_m, E), lambda i, ids: (i, 0)),
                scratch_shapes=[pltpu.SemaphoreType.DMA((window,))],
            ),
            compiler_params=pltpu.CompilerParams(
                dimension_semantics=("parallel",),
            ),
            cost_estimate=cost,
        )(flat_ids, weight)

    return out[:n]


def embedding_forward(ids, weight, *, force_hbm: bool = False):
    """Pallas embedding lookup.

    ids    : int array of any shape (e.g. (B, S))
    weight : (vocab_size, embed_size) table (float32 / bfloat16 / ...)
    returns: ids.shape + (embed_size,), dtype = weight.dtype
    """
    orig_shape = ids.shape
    V, E = weight.shape
    # Clamp OOB ids so every gather address is in range (torch errors; here we
    # keep it deterministic -- assert validity upstream if strictness matters).
    flat = jnp.clip(ids.reshape(-1).astype(jnp.int32), 0, V - 1)
    n = flat.shape[0]

    if n <= MAX_TOKENS_PER_CALL:
        out = _embed_call(flat, weight, force_hbm=force_hbm)
    else:
        # Chunk so the scalar-prefetched ids never overflow SMEM
        # (1-D SMEM allocations pad to next_pow2(4N)).
        parts = [
            _embed_call(flat[s:s + MAX_TOKENS_PER_CALL], weight, force_hbm=force_hbm)
            for s in range(0, n, MAX_TOKENS_PER_CALL)
        ]
        out = jnp.concatenate(parts, axis=0)

    return out.reshape(*orig_shape, E)


def init_embedding_weight(key, vocab_size, embed_size, pad_index):
    """Matches Embedding.reset_parameters(): N(0, embed_size**-0.5), pad row = 0."""
    w = jax.random.normal(key, (vocab_size, embed_size), dtype=jnp.float32)
    w = w * (embed_size ** -0.5)
    w = w.at[pad_index].set(0.0)
    return w


if __name__ == "__main__":
    vocab_size, embed_size, pad_index = 64, 32, 0
    batch, seq = 2, 8

    key = jax.random.PRNGKey(0)
    k_w, k_ids = jax.random.split(key)

    weight = init_embedding_weight(k_w, vocab_size, embed_size, pad_index)
    ids = jax.random.randint(k_ids, (batch, seq), 0, vocab_size, dtype=jnp.int32)
    ids = ids.at[0, 0].set(pad_index)   # exercise the zeroed pad row

    ref = weight[ids]

    # Path 1: VMEM-resident fast path (8 KiB table -> resident in VMEM).
    out = jax.block_until_ready(embedding_forward(ids, weight))
    assert out.shape == (batch, seq, embed_size), out.shape
    assert jnp.allclose(out, ref), float(jnp.abs(out - ref).max())
    assert jnp.allclose(out[0, 0], 0.0), "pad_index row must embed to zeros"

    # Path 2: HBM DMA-gather path (forced here; used automatically when the
    # table does not fit the VMEM budget).  Same semantics, exact match.
    out2 = jax.block_until_ready(embedding_forward(ids, weight, force_hbm=True))
    assert out2.shape == (batch, seq, embed_size), out2.shape
    assert jnp.allclose(out2, ref), float(jnp.abs(out2 - ref).max())

    print("KERNEL_OK")
</pallas_src>

<mosaic_0001>
module attributes {stable_mosaic.version = 11 : i64} {
  func.func @_embed_vmem_kernel(%arg0: i32, %arg1: memref<16xi32, #tpu.memory_space<smem>>, %arg2: memref<64x32xf32, #tpu.memory_space<vmem>>, %arg3: memref<8x32xf32, #tpu.memory_space<vmem>>) attributes {dimension_semantics = [#tpu.dimension_semantics<parallel>], iteration_bounds = array<i64: 2>, scalar_prefetch = 1 : i64, scratch_operands = 0 : i64, tpu.core_type = #tpu.core_type<tc>, window_params = [{pipeline_mode = #tpu.pipeline_mode<synchronous>, transform_indices = @transform_0, window_bounds = array<i64: 64, 32>}, {transform_indices = @transform_1, window_bounds = array<i64: 8, 32>}]} {
    %c8_i32 = arith.constant 8 : i32
    %0 = arith.muli %arg0, %c8_i32 : i32
    %c0_i32 = arith.constant 0 : i32
    %c8_i32_0 = arith.constant 8 : i32
    %1 = arith.muli %c0_i32, %c8_i32_0 : i32
    %2 = tpu.assume_multiple %1, 8 : i32
    %3 = arith.addi %0, %2 : i32
    %c0_i32_1 = arith.constant 0 : i32
    %4 = arith.addi %3, %c0_i32_1 : i32
    %5 = arith.index_cast %4 : i32 to index
    %6 = memref.load %arg1[%5] : memref<16xi32, #tpu.memory_space<smem>>
    %7 = arith.index_cast %6 : i32 to index
    %c0 = arith.constant 0 : index
    %8 = vector.load %arg2[%7, %c0] : memref<64x32xf32, #tpu.memory_space<vmem>>, vector<1x32xf32>
    %9 = arith.addi %0, %2 : i32
    %c1_i32 = arith.constant 1 : i32
    %10 = arith.addi %9, %c1_i32 : i32
    %11 = arith.index_cast %10 : i32 to index
    %12 = memref.load %arg1[%11] : memref<16xi32, #tpu.memory_space<smem>>
    %13 = arith.index_cast %12 : i32 to index
    %c0_2 = arith.constant 0 : index
    %14 = vector.load %arg2[%13, %c0_2] : memref<64x32xf32, #tpu.memory_space<vmem>>, vector<1x32xf32>
    %15 = arith.addi %0, %2 : i32
    %c2_i32 = arith.constant 2 : i32
    %16 = arith.addi %15, %c2_i32 : i32
    %17 = arith.index_cast %16 : i32 to index
    %18 = memref.load %arg1[%17] : memref<16xi32, #tpu.memory_space<smem>>
    %19 = arith.index_cast %18 : i32 to index
    %c0_3 = arith.constant 0 : index
    %20 = vector.load %arg2[%19, %c0_3] : memref<64x32xf32, #tpu.memory_space<vmem>>, vector<1x32xf32>
    %21 = arith.addi %0, %2 : i32
    %c3_i32 = arith.constant 3 : i32
    %22 = arith.addi %21, %c3_i32 : i32
    %23 = arith.index_cast %22 : i32 to index
    %24 = memref.load %arg1[%23] : memref<16xi32, #tpu.memory_space<smem>>
    %25 = arith.index_cast %24 : i32 to index
    %c0_4 = arith.constant 0 : index
    %26 = vector.load %arg2[%25, %c0_4] : memref<64x32xf32, #tpu.memory_space<vmem>>, vector<1x32xf32>
    %27 = arith.addi %0, %2 : i32
    %c4_i32 = arith.constant 4 : i32
    %28 = arith.addi %27, %c4_i32 : i32
    %29 = arith.index_cast %28 : i32 to index
    %30 = memref.load %arg1[%29] : memref<16xi32, #tpu.memory_space<smem>>
    %31 = arith.index_cast %30 : i32 to index
    %c0_5 = arith.constant 0 : index
    %32 = vector.load %arg2[%31, %c0_5] : memref<64x32xf32, #tpu.memory_space<vmem>>, vector<1x32xf32>
    %33 = arith.addi %0, %2 : i32
    %c5_i32 = arith.constant 5 : i32
    %34 = arith.addi %33, %c5_i32 : i32
    %35 = arith.index_cast %34 : i32 to index
    %36 = memref.load %arg1[%35] : memref<16xi32, #tpu.memory_space<smem>>
    %37 = arith.index_cast %36 : i32 to index
    %c0_6 = arith.constant 0 : index
    %38 = vector.load %arg2[%37, %c0_6] : memref<64x32xf32, #tpu.memory_space<vmem>>, vector<1x32xf32>
    %39 = arith.addi %0, %2 : i32
    %c6_i32 = arith.constant 6 : i32
    %40 = arith.addi %39, %c6_i32 : i32
    %41 = arith.index_cast %40 : i32 to index
    %42 = memref.load %arg1[%41] : memref<16xi32, #tpu.memory_space<smem>>
    %43 = arith.index_cast %42 : i32 to index
    %c0_7 = arith.constant 0 : index
    %44 = vector.load %arg2[%43, %c0_7] : memref<64x32xf32, #tpu.memory_space<vmem>>, vector<1x32xf32>
    %45 = arith.addi %0, %2 : i32
    %c7_i32 = arith.constant 7 : i32
    %46 = arith.addi %45, %c7_i32 : i32
    %47 = arith.index_cast %46 : i32 to index
    %48 = memref.load %arg1[%47] : memref<16xi32, #tpu.memory_space<smem>>
    %49 = arith.index_cast %48 : i32 to index
    %c0_8 = arith.constant 0 : index
    %50 = vector.load %arg2[%49, %c0_8] : memref<64x32xf32, #tpu.memory_space<vmem>>, vector<1x32xf32>
    %51 = tpu.concatenate %8, %14, %20, %26, %32, %38, %44, %50 in 0 : vector<1x32xf32>, vector<1x32xf32>, vector<1x32xf32>, vector<1x32xf32>, vector<1x32xf32>, vector<1x32xf32>, vector<1x32xf32>, vector<1x32xf32> -> vector<8x32xf32>
    %52 = arith.index_cast %2 : i32 to index
    %c0_9 = arith.constant 0 : index
    %53 = vector.load %arg3[%52, %c0_9] : memref<8x32xf32, #tpu.memory_space<vmem>>, vector<8x32xf32>
    tpu.vector_store %arg3[%52, %c0_9], %51 {strides = array<i32>} : memref<8x32xf32, #tpu.memory_space<vmem>>, vector<8x32xf32>,
    %c1_i32_10 = arith.constant 1 : i32
    return
  }
  func.func @transform_0(%arg0: i32, %arg1: memref<16xi32, #tpu.memory_space<smem>>) -> (i32, i32) {
    %c0_i32 = arith.constant 0 : i32
    %c0_i32_0 = arith.constant 0 : i32
    %c0_i32_1 = arith.constant 0 : i32
    return %c0_i32, %c0_i32_0 : i32, i32
  }
  func.func @transform_1(%arg0: i32, %arg1: memref<16xi32, #tpu.memory_space<smem>>) -> (i32, i32) {
    %c0_i32 = arith.constant 0 : i32
    %c0_i32_0 = arith.constant 0 : i32
    return %arg0, %c0_i32 : i32, i32
  }
}

</mosaic_0001>

<llo_original>
// kernel: tpu_custom_call.1
$region0: #{tpu_custom_call.1}
  #allocation0 [shape = 'u32[]', space=smem, size = 0x4, offset = 0x4, fixed_abs, tag = 'smem constant byte address 0x4 - core index']
  #allocation1 [shape = 'u32[72,128]{1,0:T(1,128)}', space=vmem, size = 0x9000, scoped, tag = 'internal scratch']
  #allocation2 [shape = 's32[1]{0}', space=sflag, size = 0x4, scoped, tag = 'scoped memory for tpu_custom_call.1']
  #allocation3 [shape = 'u8[512]{0}', space=smem, size = 0x200, scoped, tag = 'prefetched SMEM operand 0']
  %s0 = inlined_call_operand.vmem [shape: s32[16], index: 0, kind: input, shape index: {}]
  %s1 = inlined_call_operand.vmem [shape: f32[64,32], index: 1, kind: input, shape index: {}]
  %s2 = inlined_call_operand.hbm [shape: f32[16,32], index: 2, kind: output, shape index: {}]
  %s3 = sld [smem:[#allocation0]]
  $region37: #{tpu_custom_call.1} parent=0
    _
  %s5 = ssub.s32 1, %s3
  %s6 = scalar_select 0, %s5, %s3
  %s8 = sshll.u32 %s0, 4
  %s9 = int_to_ptr.vmem [resolvable:$true] %s8
  %11 = dma.vmem_to_smem %s9, 16, [#allocation3], [#allocation2]
  %13 = dma.done [#allocation2], 16
  %14 = sfence
  $region1: #{tpu_custom_call.1} parent=0
    #allocation4 [shape = 'u8[8192]{0}', space=vmem, size = 0x2000, scoped, tag = 'output window, operand 0']
    #allocation5 [shape = 's32[2]{0}', space=sflag, size = 0x8, scoped, tag = 'scoped memory for tpu_custom_call.1']
    %15 = vsyncpa [#allocation5], 0
    %s16 = scalar_lea.sflag [#allocation5], 1
    %17 = vsyncpa %s16, 0
    loop: start=0, step=1, limit=4
    $region2: #{tpu_custom_call.1} parent=1 // loop_pre_header
      _
    $region3: #{tpu_custom_call.1} parent=1 // loop_header
      %s19 = sphi 0, %s23
      %p20 = scmp.ge.s32.totalorder %s19, 4
      %s27 = sphi 0, %s27
      %s29 = sphi 0, %s27
      %s30 = sphi 0, %s29
      %s44 = sphi 0, %s30
      %s50 = sphi 0, %s52
      %s53 = sphi 0, %s50
      %s54 = sphi 0, %s53
      %s70 = sphi 0, %s54
    $region4: #{tpu_custom_call.1} parent=1 // loop_header_branch
      %22 = sbr.rel (%p20) target = $region8
    $region5: #{tpu_custom_call.1} parent=1 // loop_body
      %s24 = ssub.s32 %s19, 1
      %s25 = ssub.s32 %s19, 2
      %s26 = sadd.s32 %s19, 1
      %s28 = sadd.s32 %s27, 1
      %p31 = scmp.eq.s32.totalorder %s19, 1
      %p32 = scmp.ne.s32.totalorder %s27, %s29
      %p33 = scmp.eq.s32.totalorder %s19, 0
      %p34 = por %p32, %p33
      %p35 = scmp.ne.s32.totalorder %s27, %s29
      %p36 = scmp.eq.s32.totalorder %s24, 1
      %p37 = por %p35, %p36
      %p38 = scmp.ne.s32.totalorder %s29, %s30
      %p39 = scmp.eq.s32.totalorder %s24, 0
      %p40 = por %p38, %p39
      %p41 = scmp.ne.s32.totalorder %s29, %s30
      %p42 = scmp.eq.s32.totalorder %s25, 1
      %p43 = por %p41, %p42
      %p45 = scmp.ne.s32.totalorder %s30, %s44
      %p46 = scmp.eq.s32.totalorder %s25, 0
      %p47 = por %p45, %p46
      %s48 = ssub.s32 %s19, %s26
      %p49 = scmp.eq.s32.totalorder %s48, 0
      %s51 = sadd.s32 %s50, 1
      %s52 = scalar_select %p49, %s50, %s51
      %p55 = pneg %p49
      %p56 = scmp.eq.s32.totalorder %s19, 1
      %p57 = por %p55, %p56
      %p58 = scmp.ne.s32.totalorder %s50, %s53
      %p59 = scmp.eq.s32.totalorder %s19, 0
      %p60 = por %p58, %p59
      %p61 = scmp.ne.s32.totalorder %s50, %s53
      %p62 = scmp.eq.s32.totalorder %s24, 1
      %p63 = por %p61, %p62
      %p64 = scmp.ne.s32.totalorder %s53, %s54
      %p65 = scmp.eq.s32.totalorder %s24, 0
      %p66 = por %p64, %p65
      %p67 = scmp.ne.s32.totalorder %s53, %s54
      %p68 = scmp.eq.s32.totalorder %s25, 1
      %p69 = por %p67, %p68
      %p71 = scmp.ne.s32.totalorder %s54, %s70
      %p72 = scmp.eq.s32.totalorder %s25, 0
      %p73 = por %p71, %p72
      %p74 = scmp.le.s32.totalorder 1, %s19
      %p75 = scmp.lt.s32.totalorder %s19, 3
      %p76 = pnand %p74, %p75
      %p77 = pneg %p76
      // Predicated region
      $region9: #{tpu_custom_call.1} parent=5 // pred_check
        _
      $region10: #{tpu_custom_call.1} parent=5 // pred_check_branch
        %79 = sbr.rel (%p76) target = $region12
      $region11: #{tpu_custom_call.1} parent=5 // pred_region
        %s80 = ssub.s32 %s19, 1
        // Predicated region
        $region13: #{tpu_custom_call.1} parent=11 // pred_check
          %p81 = pneg %p40
        $region14: #{tpu_custom_call.1} parent=11 // pred_check_branch
          %83 = sbr.rel (%p81) target = $region16
        $region15: #{tpu_custom_call.1} parent=11 // pred_region
          _
        $region16: #{tpu_custom_call.1} parent=11 // pred_fallthru
          _
      $region12: #{tpu_custom_call.1} parent=5 // pred_fallthru
        _
      %p84 = scmp.lt.s32.totalorder %s19, 2
      // Predicated region
      $region17: #{tpu_custom_call.1} parent=5 // pred_check
        %p85 = pneg %p84
      $region18: #{tpu_custom_call.1} parent=5 // pred_check_branch
        %87 = sbr.rel (%p85) target = $region20
      $region19: #{tpu_custom_call.1} parent=5 // pred_region
        _
      $region20: #{tpu_custom_call.1} parent=5 // pred_fallthru
        _
      %p88 = scmp.le.s32.totalorder 1, %s19
      %p89 = scmp.lt.s32.totalorder %s19, 3
      %p90 = pnand %p88, %p89
      %p91 = pneg %p90
      // Predicated region
      $region21: #{tpu_custom_call.1} parent=5 // pred_check
        _
      $region22: #{tpu_custom_call.1} parent=5 // pred_check_branch
        %93 = sbr.rel (%p90) target = $region24
      $region23: #{tpu_custom_call.1} parent=5 // pred_region
        %s94 = ssub.s32 %s19, 1
        %p95 = pneg %p40
        %p96 = pneg %p37
        %p97 = pneg %p66
        %p98 = pneg %p63
        %s99 = sand.u32 %s53, 1
        %s100 = scalar_lea.sflag [#allocation5], %s99
        %s101 = sand.u32 %s53, 1
        %s102 = smul.addr %s101, 8
        %s103 = scalar_lea.vmem [#allocation4], %s102
        %s104 = smul.u32 %s24, 8
        %s105 = sadd.s32 %s104, 0
        %s106 = sld [smem:[#allocation3 + %s105]]
        %s107 = scalar_lea.vmem %s1, %s106
        %v108 = vld [vmem:[%s107] sm:$0x1]
        %s109 = sadd.s32 %s105, 1
        %s110 = sld [smem:[#allocation3 + %s109]]
        %s111 = scalar_lea.vmem %s1, %s110
        %v112 = vld [vmem:[%s111] sm:$0x1]
        %s113 = sadd.s32 %s105, 2
        %s114 = sld [smem:[#allocation3 + %s113]]
        %s115 = scalar_lea.vmem %s1, %s114
        %v116 = vld [vmem:[%s115] sm:$0x1]
        %s117 = sadd.s32 %s105, 3
        %s118 = sld [smem:[#allocation3 + %s117]]
        %s119 = scalar_lea.vmem %s1, %s118
        %v120 = vld [vmem:[%s119] sm:$0x1]
        %s121 = sadd.s32 %s105, 4
        %s122 = sld [smem:[#allocation3 + %s121]]
        %s123 = scalar_lea.vmem %s1, %s122
        %v124 = vld [vmem:[%s123] sm:$0x1]
        %s125 = sadd.s32 %s105, 5
        %s126 = sld [smem:[#allocation3 + %s125]]
        %s127 = scalar_lea.vmem %s1, %s126
        %v128 = vld [vmem:[%s127] sm:$0x1]
        %s129 = sadd.s32 %s105, 6
        %s130 = sld [smem:[#allocation3 + %s129]]
        %s131 = scalar_lea.vmem %s1, %s130
        %v132 = vld [vmem:[%s131] sm:$0x1]
        %s133 = sadd.s32 %s105, 7
        %s134 = sld [smem:[#allocation3 + %s133]]
        %s135 = scalar_lea.vmem %s1, %s134
        %v136 = vld [vmem:[%s135] sm:$0x1]
        %v138 = vrot.slane %v112, 7
        %v141 = vrot.slane %v116, 6
        %v144 = vrot.slane %v120, 5
        %v147 = vrot.slane %v124, 4
        %v150 = vrot.slane %v128, 3
        %v153 = vrot.slane %v132, 2
        %v156 = vrot.slane %v136, 1
        %vm158 = vcmask 1040384
        %v159 = vsel %vm158, %v108, %v138
        %vm160 = vcmask 1041408
        %v161 = vsel %vm160, %v159, %v141
        %vm162 = vcmask 1042432
        %v163 = vsel %vm162, %v161, %v144
        %vm164 = vcmask 1043456
        %v165 = vsel %vm164, %v163, %v147
        %vm166 = vcmask 1044480
        %v167 = vsel %vm166, %v165, %v150
        %vm168 = vcmask 1045504
        %v169 = vsel %vm168, %v167, %v153
        %vm170 = vcmask 1046528
        %v171 = vsel %vm170, %v169, %v156
        %vm172 = vcmask 261120
        %173 = vst.msk [vmem:[%s103] sm:$0xff] %vm172, %v171
        %s174 = sand.u32 %s53, 1
        %s175 = scalar_lea.sflag [#allocation5], %s174
        %s176 = sand.u32 %s53, 1
        %s177 = smul.addr %s176, 8
        %s178 = scalar_lea.vmem [#allocation4], %s177
        // Predicated region
        $region25: #{tpu_custom_call.1} parent=23 // pred_check
          %p179 = pneg %p63
        $region26: #{tpu_custom_call.1} parent=23 // pred_check_branch
          %181 = sbr.rel (%p179) target = $region28
        $region27: #{tpu_custom_call.1} parent=23 // pred_region
          %183 = vsyncadd %s175, 0
          %s184 = smul.addr %s24, 8
          %s185 = scalar_lea.hbm %s2, %s184
          %s187 = sshll.u32 %s178, 4
          %s188 = int_to_ptr.vmem [resolvable:$true] %s187
          %s189 = sshll.u32 %s185, 4
          %s190 = int_to_ptr.hbm [resolvable:$true] %s189
          %192 = dma.vmem_to_hbm [thread:$0]  %s188, 128, %s190, %s175
        $region28: #{tpu_custom_call.1} parent=23 // pred_fallthru
          _
      $region24: #{tpu_custom_call.1} parent=5 // pred_fallthru
        _
      %p193 = scmp.le.s32.totalorder 2, %s19
      // Predicated region
      $region29: #{tpu_custom_call.1} parent=5 // pred_check
        %p194 = pneg %p193
      $region30: #{tpu_custom_call.1} parent=5 // pred_check_branch
        %196 = sbr.rel (%p194) target = $region32
      $region31: #{tpu_custom_call.1} parent=5 // pred_region
        %s197 = ssub.s32 %s19, 2
        // Predicated region
        $region33: #{tpu_custom_call.1} parent=31 // pred_check
          %p198 = pneg %p69
        $region34: #{tpu_custom_call.1} parent=31 // pred_check_branch
          %200 = sbr.rel (%p198) target = $region36
        $region35: #{tpu_custom_call.1} parent=31 // pred_region
          %s201 = sand.u32 %s54, 1
          %s202 = scalar_lea.sflag [#allocation5], %s201
          %s203 = sand.u32 %s54, 1
          %s204 = smul.addr %s203, 8
          %s205 = scalar_lea.vmem [#allocation4], %s204
          %207 = dma.done %s202, 128
        $region36: #{tpu_custom_call.1} parent=31 // pred_fallthru
          _
      $region32: #{tpu_custom_call.1} parent=5 // pred_fallthru
        _
    $region6: #{tpu_custom_call.1} parent=1 // loop_footer
      %s23 = sadd.s32 1, %s19
    $region7: #{tpu_custom_call.1} parent=1 // loop_footer_branch
      %18 = sbr.rel target = $region3
    $region8: #{tpu_custom_call.1} parent=1 // loop_exit
      _
    %208 = vsyncpa [#allocation5], 1
    %s209 = scalar_lea.sflag [#allocation5], 1
    %210 = vsyncpa %s209, 1

</llo_original>
